<compile_context>
chip_gen: v5e
topology: v5e:2x2
jax: 0.10.0
libtpu: 0.0.40
codegen_flags: <defaults>
</compile_context>

<pallas_src>
import functools

import jax
import jax.numpy as jnp
from jax import lax
from jax.experimental import pallas as pl
from jax.experimental.pallas import tpu as pltpu


def _round_up(a: int, m: int) -> int:
    return (a + m - 1) // m * m


def rvq_kernel(x_ref, cbt_ref, cb_ref, hcsq_ref, idx_ref, quant_ref):
    """One tile of rows: sequential residual VQ over all quantizer levels."""
    num_q = cb_ref.shape[0]
    tn = x_ref.shape[0]
    big = jnp.int32(jnp.iinfo(jnp.int32).max)

    # Split the row tile into two independent chains for large tiles so the MXU
    # stays busy through each chain's argmin / one-hot epilogue.
    n_split = 2 if (tn >= 256 and tn % 16 == 0) else 1
    sub = tn // n_split
    row_offs = [s * sub for s in range(n_split)]

    residuals = [x_ref[pl.ds(off, sub), :].astype(jnp.float32) for off in row_offs]
    accs = [jnp.zeros_like(r) for r in residuals]

    # Q is small and static -> unrolled Python loop.
    for q in range(num_q):
        cbt = cbt_ref[q]         # (Dp, Kp)  distance matmul, NN form (no transpose)
        cb = cb_ref[q]           # (Kp, Dp)  one-hot gather, NN form
        half_csq = hcsq_ref[q]   # (1, Kp)   precomputed 0.5*||c||^2 (+inf for pads)

        for s in range(n_split):
            r = residuals[s]
            # Reduced squared distance: 0.5*||c||^2 - r.c  (argmin-invariant).
            cross = jnp.dot(r.astype(cbt_ref.dtype), cbt,
                            preferred_element_type=jnp.float32)       # (sub, Kp) MXU
            dist = half_csq - cross                                   # (sub, Kp)

            # argmin over K with first-min tie-break (matches torch.argmin).
            min_val = jnp.min(dist, axis=-1, keepdims=True)           # (sub, 1)
            iota = lax.broadcasted_iota(jnp.int32, dist.shape, 1)     # (sub, Kp)
            idx = jnp.min(jnp.where(dist == min_val, iota, big), axis=-1)  # (sub,)

            # Codebook gather as a one-hot matmul (MXU).
            onehot = (iota == idx[:, None]).astype(jnp.float32)       # (sub, Kp)
            quant = jnp.dot(onehot, cb,
                            preferred_element_type=jnp.float32)       # (sub, Dp)

            # Direct per-level store (tiny volume; keeps live ranges short).
            idx_ref[pl.ds(q, 1), pl.ds(row_offs[s], sub)] = idx[None, :]

            accs[s] = accs[s] + quant
            residuals[s] = r - quant

    for s in range(n_split):
        quant_ref[pl.ds(row_offs[s], sub), :] = accs[s].astype(quant_ref.dtype)


def residual_vector_quantize(x, codebooks, tile_n=None, use_bf16_cross=False):
    """x: (B, L, D) float32, codebooks: (Q, K, D) float32.
    Returns (indices (B, Q, L) int32, quantized (B, L, D) float32)."""
    B, L, D = x.shape
    Q, K, Dc = codebooks.shape
    assert Dc == D
    N = B * L
    f32 = 4

    d_pad = _round_up(D, 128)
    k_pad = _round_up(K, 128)

    # Per-generation VMEM budget (v5e/v6e: 128 MiB, v7x: 64 MiB) with headroom
    # left for compiler-internal scratch / Mosaic temporaries.
    try:
        info = pltpu.get_tpu_info()
        vmem_cap = int(getattr(info, "vmem_capacity_bytes", 64 << 20))
    except Exception:  # pragma: no cover - conservative fallback
        vmem_cap = 64 << 20
    vmem_budget = int(vmem_cap * 0.78)

    # Resident, single-buffered invariants: both codebook layouts + 0.5||c||^2.
    resident = 2 * Q * k_pad * d_pad * f32 + Q * k_pad * f32

    def _est(tn):
        stream = 2 * (2 * tn * d_pad * f32)                 # x in + quant out (2-buf)
        idx_b = 2 * _round_up(Q, 8) * max(tn, 128) * 4      # index output blocks
        work = 6 * tn * k_pad * f32 + 4 * tn * d_pad * f32  # dist/onehot/residual
        return resident + stream + idx_b + work

    n8 = _round_up(N, 8)
    if tile_n is not None:
        tn = max(8, min(_round_up(tile_n, 8), n8))
        if tn < n8 and tn % 128 != 0:
            tn = max(128, (tn // 128) * 128)
    elif n8 < 256:
        tn = n8                                  # single tile; block == full dims
    else:
        tn = 128
        for cand in (1024, 512, 256, 128):       # biggest lane-dense tile that fits
            if _est(cand) <= int(vmem_budget * 0.9):
                tn = cand
                break
        # Keep >= 2 grid steps so ("parallel",) can shard across v7x's 2 TCs.
        while tn > 128 and pl.cdiv(N, tn) < 2:
            tn //= 2
    n_pad = _round_up(N, tn)

    # Pad only when required (gates the HBM pad/slice round-trips).
    xf = x.reshape(N, D)
    if n_pad != N or d_pad != D:
        xf = jnp.pad(xf, ((0, n_pad - N), (0, d_pad - D)))

    cb_p = codebooks
    if k_pad != K or d_pad != D:
        cb_p = jnp.pad(codebooks, ((0, 0), (0, k_pad - K), (0, d_pad - D)))
    cb_t = jnp.transpose(cb_p, (0, 2, 1))        # (Q, Dp, Kp): transpose once in HBM
    if use_bf16_cross:
        cb_t = cb_t.astype(jnp.bfloat16)         # optional MXU fast path (approx ties)

    half_csq = 0.5 * jnp.sum(codebooks.astype(jnp.float32) ** 2, axis=-1)  # (Q, K)
    if k_pad != K:
        half_csq = jnp.pad(half_csq, ((0, 0), (0, k_pad - K)),
                           constant_values=jnp.inf)          # pads can never win
    half_csq = half_csq[:, None, :]                          # (Q, 1, Kp)

    vmem_est = _est(tn)
    vmem_limit = int(min(vmem_budget, max(32 << 20, int(1.5 * vmem_est))))
    vmem_limit = max(vmem_limit, vmem_est + (4 << 20))
    vmem_limit = int(min(vmem_limit, vmem_cap * 0.85))

    cost = pl.CostEstimate(
        flops=int(Q * 2 * (2 * n_pad * k_pad * d_pad)),          # cross + gather matmuls
        transcendentals=0,
        bytes_accessed=int(n_pad * d_pad * f32 * 2
                           + 2 * Q * k_pad * d_pad * f32
                           + Q * k_pad * f32 + Q * n_pad * 4),
    )

    idx_qn, quant_p = pl.pallas_call(
        rvq_kernel,
        out_shape=(
            jax.ShapeDtypeStruct((Q, n_pad), jnp.int32),
            jax.ShapeDtypeStruct((n_pad, d_pad), x.dtype),
        ),
        grid_spec=pltpu.PrefetchScalarGridSpec(
            num_scalar_prefetch=0,
            grid=(n_pad // tn,),
            in_specs=[
                pl.BlockSpec((tn, d_pad), lambda i: (i, 0)),            # residual rows
                pl.BlockSpec((Q, d_pad, k_pad), lambda i: (0, 0, 0),
                             pipeline_mode=pl.Buffered(1)),             # cb^T (resident)
                pl.BlockSpec((Q, k_pad, d_pad), lambda i: (0, 0, 0),
                             pipeline_mode=pl.Buffered(1)),             # cb (resident)
                pl.BlockSpec((Q, 1, k_pad), lambda i: (0, 0, 0),
                             pipeline_mode=pl.Buffered(1)),             # 0.5*||c||^2
            ],
            out_specs=[
                pl.BlockSpec((Q, tn), lambda i: (0, i)),                # lane-dense idx
                pl.BlockSpec((tn, d_pad), lambda i: (i, 0)),            # summed quant
            ],
        ),
        compiler_params=pltpu.CompilerParams(
            dimension_semantics=("parallel",),
            vmem_limit_bytes=vmem_limit,
        ),
        cost_estimate=cost,
    )(xf, cb_t, cb_p, half_csq)

    indices = idx_qn[:, :N].reshape(Q, B, L).transpose(1, 0, 2)   # (B, Q, L)
    quantized = quant_p[:N, :D].reshape(B, L, D) if (n_pad != N or d_pad != D) \
        else quant_p.reshape(B, L, D)
    return indices, quantized


def rvq_reference(x, codebooks):
    """Pure-JAX reference mirroring the PyTorch forward (exact cdist)."""
    residual = x
    quantized = jnp.zeros_like(x)
    idx_list = []
    for q in range(codebooks.shape[0]):
        cb = codebooks[q]                                          # (K, D)
        diff = residual[..., None, :] - cb[None, None, :, :]       # (B, L, K, D)
        dist = jnp.sum(diff * diff, axis=-1)                       # (B, L, K)
        idx = jnp.argmin(dist, axis=-1)                            # (B, L)
        quant = cb[idx]                                            # (B, L, D)
        idx_list.append(idx)
        quantized = quantized + quant
        residual = residual - quant
    return jnp.stack(idx_list, axis=1).astype(jnp.int32), quantized


def _check(B, L, D, K, Q, key):
    kx, kc = jax.random.split(key)
    x = jax.random.normal(kx, (B, L, D), dtype=jnp.float32)
    codebooks = jax.random.normal(kc, (Q, K, D), dtype=jnp.float32)

    indices, quantized = residual_vector_quantize(x, codebooks)
    jax.block_until_ready((indices, quantized))

    ref_idx, ref_quant = rvq_reference(x, codebooks)
    assert indices.shape == (B, Q, L)
    assert quantized.shape == (B, L, D)
    assert jnp.array_equal(indices, ref_idx), "index mismatch vs reference"
    assert jnp.allclose(quantized, ref_quant, atol=1e-4), "quantized mismatch vs reference"


if __name__ == "__main__":
    key = jax.random.PRNGKey(0)
    k1, k2 = jax.random.split(key)

    # Small shape consistent with the module's (B, L, D) input (single-tile path).
    _check(B=2, L=8, D=32, K=64, Q=3, key=k1)
    # Slightly larger shape to exercise the multi-tile / two-chain interleave path.
    _check(B=2, L=256, D=64, K=256, Q=4, key=k2)

    print("KERNEL_OK")
</pallas_src>

<mosaic_0001>
module attributes {stable_mosaic.version = 11 : i64} {
  func.func @rvq_kernel(%arg0: i32, %arg1: memref<16x128xf32, #tpu.memory_space<vmem>>, %arg2: memref<3x128x128xf32, #tpu.memory_space<vmem>>, %arg3: memref<3x128x128xf32, #tpu.memory_space<vmem>>, %arg4: memref<3x1x128xf32, #tpu.memory_space<vmem>>, %arg5: memref<3x16xi32, #tpu.memory_space<vmem>>, %arg6: memref<16x128xf32, #tpu.memory_space<vmem>>) attributes {dimension_semantics = [#tpu.dimension_semantics<parallel>], iteration_bounds = array<i64: 1>, scalar_prefetch = 0 : i64, scratch_operands = 0 : i64, tpu.core_type = #tpu.core_type<tc>, window_params = [{transform_indices = @transform_0, window_bounds = array<i64: 16, 128>}, {pipeline_mode = #tpu.pipeline_mode<synchronous>, transform_indices = @transform_1, window_bounds = array<i64: 3, 128, 128>}, {pipeline_mode = #tpu.pipeline_mode<synchronous>, transform_indices = @transform_2, window_bounds = array<i64: 3, 128, 128>}, {pipeline_mode = #tpu.pipeline_mode<synchronous>, transform_indices = @transform_3, window_bounds = array<i64: 3, 1, 128>}, {transform_indices = @transform_4, window_bounds = array<i64: 3, 16>}, {transform_indices = @transform_5, window_bounds = array<i64: 16, 128>}]} {
    %c0 = arith.constant 0 : index
    %c0_0 = arith.constant 0 : index
    %0 = vector.load %arg1[%c0, %c0_0] : memref<16x128xf32, #tpu.memory_space<vmem>>, vector<16x128xf32>
    %cst = arith.constant 0.000000e+00 : f32
    %1 = vector.broadcast %cst : f32 to vector<16x128xf32>
    %c0_1 = arith.constant 0 : index
    %c0_2 = arith.constant 0 : index
    %c0_3 = arith.constant 0 : index
    %2 = vector.load %arg2[%c0_1, %c0_2, %c0_3] : memref<3x128x128xf32, #tpu.memory_space<vmem>>, vector<1x128x128xf32>
    %3 = vector.shape_cast %2 : vector<1x128x128xf32> to vector<128x128xf32>
    %c0_4 = arith.constant 0 : index
    %c0_5 = arith.constant 0 : index
    %c0_6 = arith.constant 0 : index
    %4 = vector.load %arg3[%c0_4, %c0_5, %c0_6] : memref<3x128x128xf32, #tpu.memory_space<vmem>>, vector<1x128x128xf32>
    %5 = vector.shape_cast %4 : vector<1x128x128xf32> to vector<128x128xf32>
    %c0_7 = arith.constant 0 : index
    %c0_8 = arith.constant 0 : index
    %c0_9 = arith.constant 0 : index
    %6 = vector.load %arg4[%c0_7, %c0_8, %c0_9] : memref<3x1x128xf32, #tpu.memory_space<vmem>>, vector<1x1x128xf32>
    %7 = vector.shape_cast %6 : vector<1x1x128xf32> to vector<1x128xf32>
    %cst_10 = arith.constant dense<0.000000e+00> : vector<16x128xf32>
    %8 = tpu.matmul %0, %3, %cst_10 {dimension_numbers = #tpu.dot_dimension_numbers<[1], [0], [0], [1], [0, 0, 1, 1], [], []>} : vector<16x128xf32>, vector<128x128xf32>, vector<16x128xf32> -> vector<16x128xf32>
    %9 = vector.broadcast %7 : vector<1x128xf32> to vector<16x128xf32>
    %10 = arith.subf %9, %8 : vector<16x128xf32>
    %cst_11 = arith.constant dense<0x7F800000> : vector<16xf32>
    %11 = vector.multi_reduction <minimumf>, %10, %cst_11 [1] : vector<16x128xf32> to vector<16xf32>
    %12 = vector.shape_cast %11 : vector<16xf32> to vector<16x1xf32>
    %13 = tpu.iota {dimensions = array<i32: 1>} : vector<16x128xi32>
    %14 = vector.broadcast %12 : vector<16x1xf32> to vector<16x128xf32>
    %15 = arith.cmpf oeq, %10, %14 : vector<16x128xf32>
    %c2147483647_i32 = arith.constant 2147483647 : i32
    %16 = vector.broadcast %c2147483647_i32 : i32 to vector<16x128xi32>
    %17 = arith.select %15, %13, %16 : vector<16x128xi1>, vector<16x128xi32>
    %cst_12 = arith.constant dense<2147483647> : vector<16xi32>
    %18 = vector.multi_reduction <minsi>, %17, %cst_12 [1] : vector<16x128xi32> to vector<16xi32>
    %19 = vector.shape_cast %18 : vector<16xi32> to vector<16x1xi32>
    %20 = vector.broadcast %19 : vector<16x1xi32> to vector<16x128xi32>
    %21 = arith.cmpi eq, %13, %20 : vector<16x128xi32>
    %22 = arith.extui %21 : vector<16x128xi1> to vector<16x128xi32>
    %23 = arith.sitofp %22 : vector<16x128xi32> to vector<16x128xf32>
    %cst_13 = arith.constant dense<0.000000e+00> : vector<16x128xf32>
    %24 = tpu.matmul %23, %5, %cst_13 {dimension_numbers = #tpu.dot_dimension_numbers<[1], [0], [0], [1], [0, 0, 1, 1], [], []>} : vector<16x128xf32>, vector<128x128xf32>, vector<16x128xf32> -> vector<16x128xf32>
    %25 = vector.shape_cast %18 : vector<16xi32> to vector<1x16xi32>
    %c0_14 = arith.constant 0 : index
    %c0_15 = arith.constant 0 : index
    %26 = vector.load %arg5[%c0_14, %c0_15] : memref<3x16xi32, #tpu.memory_space<vmem>>, vector<1x16xi32>
    tpu.vector_store %arg5[%c0_14, %c0_15], %25 {strides = array<i32>} : memref<3x16xi32, #tpu.memory_space<vmem>>, vector<1x16xi32>,
    %27 = arith.addf %1, %24 : vector<16x128xf32>
    %28 = arith.subf %0, %24 : vector<16x128xf32>
    %c1 = arith.constant 1 : index
    %c0_16 = arith.constant 0 : index
    %c0_17 = arith.constant 0 : index
    %29 = vector.load %arg2[%c1, %c0_16, %c0_17] : memref<3x128x128xf32, #tpu.memory_space<vmem>>, vector<1x128x128xf32>
    %30 = vector.shape_cast %29 : vector<1x128x128xf32> to vector<128x128xf32>
    %c1_18 = arith.constant 1 : index
    %c0_19 = arith.constant 0 : index
    %c0_20 = arith.constant 0 : index
    %31 = vector.load %arg3[%c1_18, %c0_19, %c0_20] : memref<3x128x128xf32, #tpu.memory_space<vmem>>, vector<1x128x128xf32>
    %32 = vector.shape_cast %31 : vector<1x128x128xf32> to vector<128x128xf32>
    %c1_21 = arith.constant 1 : index
    %c0_22 = arith.constant 0 : index
    %c0_23 = arith.constant 0 : index
    %33 = vector.load %arg4[%c1_21, %c0_22, %c0_23] : memref<3x1x128xf32, #tpu.memory_space<vmem>>, vector<1x1x128xf32>
    %34 = vector.shape_cast %33 : vector<1x1x128xf32> to vector<1x128xf32>
    %cst_24 = arith.constant dense<0.000000e+00> : vector<16x128xf32>
    %35 = tpu.matmul %28, %30, %cst_24 {dimension_numbers = #tpu.dot_dimension_numbers<[1], [0], [0], [1], [0, 0, 1, 1], [], []>} : vector<16x128xf32>, vector<128x128xf32>, vector<16x128xf32> -> vector<16x128xf32>
    %36 = vector.broadcast %34 : vector<1x128xf32> to vector<16x128xf32>
    %37 = arith.subf %36, %35 : vector<16x128xf32>
    %cst_25 = arith.constant dense<0x7F800000> : vector<16xf32>
    %38 = vector.multi_reduction <minimumf>, %37, %cst_25 [1] : vector<16x128xf32> to vector<16xf32>
    %39 = vector.shape_cast %38 : vector<16xf32> to vector<16x1xf32>
    %40 = tpu.iota {dimensions = array<i32: 1>} : vector<16x128xi32>
    %41 = vector.broadcast %39 : vector<16x1xf32> to vector<16x128xf32>
    %42 = arith.cmpf oeq, %37, %41 : vector<16x128xf32>
    %c2147483647_i32_26 = arith.constant 2147483647 : i32
    %43 = vector.broadcast %c2147483647_i32_26 : i32 to vector<16x128xi32>
    %44 = arith.select %42, %40, %43 : vector<16x128xi1>, vector<16x128xi32>
    %cst_27 = arith.constant dense<2147483647> : vector<16xi32>
    %45 = vector.multi_reduction <minsi>, %44, %cst_27 [1] : vector<16x128xi32> to vector<16xi32>
    %46 = vector.shape_cast %45 : vector<16xi32> to vector<16x1xi32>
    %47 = vector.broadcast %46 : vector<16x1xi32> to vector<16x128xi32>
    %48 = arith.cmpi eq, %40, %47 : vector<16x128xi32>
    %49 = arith.extui %48 : vector<16x128xi1> to vector<16x128xi32>
    %50 = arith.sitofp %49 : vector<16x128xi32> to vector<16x128xf32>
    %cst_28 = arith.constant dense<0.000000e+00> : vector<16x128xf32>
    %51 = tpu.matmul %50, %32, %cst_28 {dimension_numbers = #tpu.dot_dimension_numbers<[1], [0], [0], [1], [0, 0, 1, 1], [], []>} : vector<16x128xf32>, vector<128x128xf32>, vector<16x128xf32> -> vector<16x128xf32>
    %52 = vector.shape_cast %45 : vector<16xi32> to vector<1x16xi32>
    %c1_29 = arith.constant 1 : index
    %c0_30 = arith.constant 0 : index
    %53 = vector.load %arg5[%c1_29, %c0_30] : memref<3x16xi32, #tpu.memory_space<vmem>>, vector<1x16xi32>
    tpu.vector_store %arg5[%c1_29, %c0_30], %52 {strides = array<i32>} : memref<3x16xi32, #tpu.memory_space<vmem>>, vector<1x16xi32>,
    %54 = arith.addf %27, %51 : vector<16x128xf32>
    %55 = arith.subf %28, %51 : vector<16x128xf32>
    %c2 = arith.constant 2 : index
    %c0_31 = arith.constant 0 : index
    %c0_32 = arith.constant 0 : index
    %56 = vector.load %arg2[%c2, %c0_31, %c0_32] : memref<3x128x128xf32, #tpu.memory_space<vmem>>, vector<1x128x128xf32>
    %57 = vector.shape_cast %56 : vector<1x128x128xf32> to vector<128x128xf32>
    %c2_33 = arith.constant 2 : index
    %c0_34 = arith.constant 0 : index
    %c0_35 = arith.constant 0 : index
    %58 = vector.load %arg3[%c2_33, %c0_34, %c0_35] : memref<3x128x128xf32, #tpu.memory_space<vmem>>, vector<1x128x128xf32>
    %59 = vector.shape_cast %58 : vector<1x128x128xf32> to vector<128x128xf32>
    %c2_36 = arith.constant 2 : index
    %c0_37 = arith.constant 0 : index
    %c0_38 = arith.constant 0 : index
    %60 = vector.load %arg4[%c2_36, %c0_37, %c0_38] : memref<3x1x128xf32, #tpu.memory_space<vmem>>, vector<1x1x128xf32>
    %61 = vector.shape_cast %60 : vector<1x1x128xf32> to vector<1x128xf32>
    %cst_39 = arith.constant dense<0.000000e+00> : vector<16x128xf32>
    %62 = tpu.matmul %55, %57, %cst_39 {dimension_numbers = #tpu.dot_dimension_numbers<[1], [0], [0], [1], [0, 0, 1, 1], [], []>} : vector<16x128xf32>, vector<128x128xf32>, vector<16x128xf32> -> vector<16x128xf32>
    %63 = vector.broadcast %61 : vector<1x128xf32> to vector<16x128xf32>
    %64 = arith.subf %63, %62 : vector<16x128xf32>
    %cst_40 = arith.constant dense<0x7F800000> : vector<16xf32>
    %65 = vector.multi_reduction <minimumf>, %64, %cst_40 [1] : vector<16x128xf32> to vector<16xf32>
    %66 = vector.shape_cast %65 : vector<16xf32> to vector<16x1xf32>
    %67 = tpu.iota {dimensions = array<i32: 1>} : vector<16x128xi32>
    %68 = vector.broadcast %66 : vector<16x1xf32> to vector<16x128xf32>
    %69 = arith.cmpf oeq, %64, %68 : vector<16x128xf32>
    %c2147483647_i32_41 = arith.constant 2147483647 : i32
    %70 = vector.broadcast %c2147483647_i32_41 : i32 to vector<16x128xi32>
    %71 = arith.select %69, %67, %70 : vector<16x128xi1>, vector<16x128xi32>
    %cst_42 = arith.constant dense<2147483647> : vector<16xi32>
    %72 = vector.multi_reduction <minsi>, %71, %cst_42 [1] : vector<16x128xi32> to vector<16xi32>
    %73 = vector.shape_cast %72 : vector<16xi32> to vector<16x1xi32>
    %74 = vector.broadcast %73 : vector<16x1xi32> to vector<16x128xi32>
    %75 = arith.cmpi eq, %67, %74 : vector<16x128xi32>
    %76 = arith.extui %75 : vector<16x128xi1> to vector<16x128xi32>
    %77 = arith.sitofp %76 : vector<16x128xi32> to vector<16x128xf32>
    %cst_43 = arith.constant dense<0.000000e+00> : vector<16x128xf32>
    %78 = tpu.matmul %77, %59, %cst_43 {dimension_numbers = #tpu.dot_dimension_numbers<[1], [0], [0], [1], [0, 0, 1, 1], [], []>} : vector<16x128xf32>, vector<128x128xf32>, vector<16x128xf32> -> vector<16x128xf32>
    %79 = vector.shape_cast %72 : vector<16xi32> to vector<1x16xi32>
    %c2_44 = arith.constant 2 : index
    %c0_45 = arith.constant 0 : index
    %80 = vector.load %arg5[%c2_44, %c0_45] : memref<3x16xi32, #tpu.memory_space<vmem>>, vector<1x16xi32>
    tpu.vector_store %arg5[%c2_44, %c0_45], %79 {strides = array<i32>} : memref<3x16xi32, #tpu.memory_space<vmem>>, vector<1x16xi32>,
    %81 = arith.addf %54, %78 : vector<16x128xf32>
    %c0_46 = arith.constant 0 : index
    %c0_47 = arith.constant 0 : index
    %82 = vector.load %arg6[%c0_46, %c0_47] : memref<16x128xf32, #tpu.memory_space<vmem>>, vector<16x128xf32>
    tpu.vector_store %arg6[%c0_46, %c0_47], %81 {strides = array<i32>} : memref<16x128xf32, #tpu.memory_space<vmem>>, vector<16x128xf32>,
    return
  }
  func.func @transform_0(%arg0: i32) -> (i32, i32) {
    %c0_i32 = arith.constant 0 : i32
    %c0_i32_0 = arith.constant 0 : i32
    return %arg0, %c0_i32 : i32, i32
  }
  func.func @transform_1(%arg0: i32) -> (i32, i32, i32) {
    %c0_i32 = arith.constant 0 : i32
    %c0_i32_0 = arith.constant 0 : i32
    %c0_i32_1 = arith.constant 0 : i32
    %c0_i32_2 = arith.constant 0 : i32
    return %c0_i32, %c0_i32_0, %c0_i32_1 : i32, i32, i32
  }
  func.func @transform_2(%arg0: i32) -> (i32, i32, i32) {
    %c0_i32 = arith.constant 0 : i32
    %c0_i32_0 = arith.constant 0 : i32
    %c0_i32_1 = arith.constant 0 : i32
    %c0_i32_2 = arith.constant 0 : i32
    return %c0_i32, %c0_i32_0, %c0_i32_1 : i32, i32, i32
  }
  func.func @transform_3(%arg0: i32) -> (i32, i32, i32) {
    %c0_i32 = arith.constant 0 : i32
    %c0_i32_0 = arith.constant 0 : i32
    %c0_i32_1 = arith.constant 0 : i32
    %c0_i32_2 = arith.constant 0 : i32
    return %c0_i32, %c0_i32_0, %c0_i32_1 : i32, i32, i32
  }
  func.func @transform_4(%arg0: i32) -> (i32, i32) {
    %c0_i32 = arith.constant 0 : i32
    %c0_i32_0 = arith.constant 0 : i32
    return %c0_i32, %arg0 : i32, i32
  }
  func.func @transform_5(%arg0: i32) -> (i32, i32) {
    %c0_i32 = arith.constant 0 : i32
    %c0_i32_0 = arith.constant 0 : i32
    return %arg0, %c0_i32 : i32, i32
  }
}

</mosaic_0001>

<llo_original>
// kernel: tpu_custom_call.1
$region0: #{tpu_custom_call.1}
  #allocation0 [shape = 'u32[]', space=smem, size = 0x4, offset = 0x4, fixed_abs, tag = 'smem constant byte address 0x4 - core index']
  #allocation1 [shape = 'u32[72,128]{1,0:T(1,128)}', space=vmem, size = 0x9000, scoped, tag = 'internal scratch']
  %s0 = inlined_call_operand.hbm [shape: f32[16,128], index: 0, kind: input, shape index: {}]
  %s1 = inlined_call_operand.hbm [shape: f32[3,128,128], index: 1, kind: input, shape index: {}]
  %s2 = inlined_call_operand.hbm [shape: f32[3,128,128], index: 2, kind: input, shape index: {}]
  %s3 = inlined_call_operand.hbm [shape: f32[3,1,128], index: 3, kind: input, shape index: {}]
  %s4 = inlined_call_operand.hbm [shape: s32[3,16], index: 4, kind: output, shape index: {0}]
  %s5 = inlined_call_operand.hbm [shape: f32[16,128], index: 5, kind: output, shape index: {1}]
  %6 = xla_tuple %s4, %s5
  %s7 = sld [smem:[#allocation0]]
  $region50: #{tpu_custom_call.1} parent=0
    _
  %s9 = ssub.s32 1, %s7
  %s10 = scalar_select 0, %s9, %s7
  $region1: #{tpu_custom_call.1} parent=0
    #allocation2 [shape = 'u8[8192]{0}', space=vmem, size = 0x2000, scoped, tag = 'input window, operand 0, single buffered']
    #allocation3 [shape = 's32[1]{0}', space=sflag, size = 0x4, scoped, tag = 'scoped memory for tpu_custom_call.1']
    #allocation4 [shape = 's32[1]{0}', space=sflag, size = 0x4, scoped, tag = 'scoped memory for tpu_custom_call.1']
    #allocation5 [shape = 'u8[196608]{0}', space=vmem, size = 0x30000, scoped, tag = 'input window, operand 1, single buffered']
    #allocation6 [shape = 's32[1]{0}', space=sflag, size = 0x4, scoped, tag = 'scoped memory for tpu_custom_call.1']
    #allocation7 [shape = 'u8[196608]{0}', space=vmem, size = 0x30000, scoped, tag = 'input window, operand 2, single buffered']
    #allocation8 [shape = 'u8[1536]{0}', space=vmem, size = 0x800, scoped, tag = 'input window, operand 3, single buffered']
    #allocation9 [shape = 's32[1]{0}', space=sflag, size = 0x4, scoped, tag = 'scoped memory for tpu_custom_call.1']
    #allocation10 [shape = 'u8[2048]{0}', space=vmem, size = 0x800, scoped, tag = 'output window, operand 0, single buffered']
    #allocation11 [shape = 'u8[8192]{0}', space=vmem, size = 0x2000, scoped, tag = 'output window, operand 1, single buffered']
    #allocation12 [shape = 's32[1]{0}', space=sflag, size = 0x4, scoped, tag = 'scoped memory for tpu_custom_call.1']
    %11 = vsyncpa [#allocation3], 0
    %12 = vsyncpa [#allocation6], 0
    %13 = vsyncpa [#allocation9], 0
    %14 = vsyncpa [#allocation4], 0
    %15 = vsyncpa [#allocation12], 0
    // Predicated region
    $region2: #{tpu_custom_call.1} parent=1 // pred_check
      _
    $region3: #{tpu_custom_call.1} parent=1 // pred_check_branch
      %17 = sbr.rel (0) target = $region5
    $region4: #{tpu_custom_call.1} parent=1 // pred_region
      %19 = vsyncadd [#allocation3], 0
      %s20 = sshll.u32 %s0, 4
      %s21 = int_to_ptr.hbm [resolvable:$true] %s20
      %s22 = sshll.u32 [#allocation2], 4
      %s23 = int_to_ptr.vmem [resolvable:$true] %s22
      %28 = dma.hbm_to_vmem [thread:$0]  %s21, 256, %s23, [#allocation3], 128, 128, 8
    $region5: #{tpu_custom_call.1} parent=1 // pred_fallthru
      _
    // Predicated region
    $region6: #{tpu_custom_call.1} parent=1 // pred_check
      _
    $region7: #{tpu_custom_call.1} parent=1 // pred_check_branch
      %30 = sbr.rel (0) target = $region9
    $region8: #{tpu_custom_call.1} parent=1 // pred_region
      %32 = vsyncadd [#allocation6], 0
      %s33 = sshll.u32 %s1, 4
      %s34 = int_to_ptr.hbm [resolvable:$true] %s33
      %s35 = sshll.u32 [#allocation5], 4
      %s36 = int_to_ptr.vmem [resolvable:$true] %s35
      %41 = dma.hbm_to_vmem [thread:$0]  %s34, 6144, %s36, [#allocation6], 128, 128, 8
    $region9: #{tpu_custom_call.1} parent=1 // pred_fallthru
      _
    // Predicated region
    $region10: #{tpu_custom_call.1} parent=1 // pred_check
      _
    $region11: #{tpu_custom_call.1} parent=1 // pred_check_branch
      %43 = sbr.rel (0) target = $region13
    $region12: #{tpu_custom_call.1} parent=1 // pred_region
      %45 = vsyncadd [#allocation6], 0
      %s46 = sshll.u32 %s2, 4
      %s47 = int_to_ptr.hbm [resolvable:$true] %s46
      %s48 = sshll.u32 [#allocation7], 4
      %s49 = int_to_ptr.vmem [resolvable:$true] %s48
      %54 = dma.hbm_to_vmem [thread:$0]  %s47, 6144, %s49, [#allocation6], 128, 128, 8
    $region13: #{tpu_custom_call.1} parent=1 // pred_fallthru
      _
    // Predicated region
    $region14: #{tpu_custom_call.1} parent=1 // pred_check
      _
    $region15: #{tpu_custom_call.1} parent=1 // pred_check_branch
      %56 = sbr.rel (0) target = $region17
    $region16: #{tpu_custom_call.1} parent=1 // pred_region
      %58 = vsyncadd [#allocation9], 0
      %s59 = sshll.u32 %s3, 4
      %s60 = int_to_ptr.hbm [resolvable:$true] %s59
      %s61 = sshll.u32 [#allocation8], 4
      %s62 = int_to_ptr.vmem [resolvable:$true] %s61
      %67 = dma.hbm_to_vmem [thread:$0]  %s60, 48, %s62, [#allocation9], 16, 16, 1
    $region17: #{tpu_custom_call.1} parent=1 // pred_fallthru
      _
    // Predicated region
    $region18: #{tpu_custom_call.1} parent=1 // pred_check
      _
    $region19: #{tpu_custom_call.1} parent=1 // pred_check_branch
      %69 = sbr.rel (0) target = $region21
    $region20: #{tpu_custom_call.1} parent=1 // pred_region
      %71 = dma.done [#allocation3], 256
    $region21: #{tpu_custom_call.1} parent=1 // pred_fallthru
      _
    // Predicated region
    $region22: #{tpu_custom_call.1} parent=1 // pred_check
      _
    $region23: #{tpu_custom_call.1} parent=1 // pred_check_branch
      %73 = sbr.rel (0) target = $region25
    $region24: #{tpu_custom_call.1} parent=1 // pred_region
      %75 = dma.done [#allocation6], 6144
    $region25: #{tpu_custom_call.1} parent=1 // pred_fallthru
      _
    // Predicated region
    $region26: #{tpu_custom_call.1} parent=1 // pred_check
      _
    $region27: #{tpu_custom_call.1} parent=1 // pred_check_branch
      %77 = sbr.rel (0) target = $region29
    $region28: #{tpu_custom_call.1} parent=1 // pred_region
      %79 = dma.done [#allocation6], 6144
    $region29: #{tpu_custom_call.1} parent=1 // pred_fallthru
      _
    // Predicated region
    $region30: #{tpu_custom_call.1} parent=1 // pred_check
      _
    $region31: #{tpu_custom_call.1} parent=1 // pred_check_branch
      %81 = sbr.rel (0) target = $region33
    $region32: #{tpu_custom_call.1} parent=1 // pred_region
      %83 = dma.done [#allocation9], 48
    $region33: #{tpu_custom_call.1} parent=1 // pred_fallthru
      _
    %v84 = vld [vmem:[#allocation2] sm:$0xff]
    %v85 = vld [vmem:[#allocation2 + $0x8] sm:$0xff]
    %v86 = vld [vmem:[#allocation5] sm:$0xff]
    %v87 = vld [vmem:[#allocation5 + $0x8] sm:$0xff]
    %v88 = vld [vmem:[#allocation5 + $0x10] sm:$0xff]
    %v89 = vld [vmem:[#allocation5 + $0x18] sm:$0xff]
    %v90 = vld [vmem:[#allocation5 + $0x20] sm:$0xff]
    %v91 = vld [vmem:[#allocation5 + $0x28] sm:$0xff]
    %v92 = vld [vmem:[#allocation5 + $0x30] sm:$0xff]
    %v93 = vld [vmem:[#allocation5 + $0x38] sm:$0xff]
    %v94 = vld [vmem:[#allocation5 + $0x40] sm:$0xff]
    %v95 = vld [vmem:[#allocation5 + $0x48] sm:$0xff]
    %v96 = vld [vmem:[#allocation5 + $0x50] sm:$0xff]
    %v97 = vld [vmem:[#allocation5 + $0x58] sm:$0xff]
    %v98 = vld [vmem:[#allocation5 + $0x60] sm:$0xff]
    %v99 = vld [vmem:[#allocation5 + $0x68] sm:$0xff]
    %v100 = vld [vmem:[#allocation5 + $0x70] sm:$0xff]
    %v101 = vld [vmem:[#allocation5 + $0x78] sm:$0xff]
    %v102 = vld [vmem:[#allocation7] sm:$0xff]
    %v103 = vld [vmem:[#allocation7 + $0x8] sm:$0xff]
    %v104 = vld [vmem:[#allocation7 + $0x10] sm:$0xff]
    %v105 = vld [vmem:[#allocation7 + $0x18] sm:$0xff]
    %v106 = vld [vmem:[#allocation7 + $0x20] sm:$0xff]
    %v107 = vld [vmem:[#allocation7 + $0x28] sm:$0xff]
    %v108 = vld [vmem:[#allocation7 + $0x30] sm:$0xff]
    %v109 = vld [vmem:[#allocation7 + $0x38] sm:$0xff]
    %v110 = vld [vmem:[#allocation7 + $0x40] sm:$0xff]
    %v111 = vld [vmem:[#allocation7 + $0x48] sm:$0xff]
    %v112 = vld [vmem:[#allocation7 + $0x50] sm:$0xff]
    %v113 = vld [vmem:[#allocation7 + $0x58] sm:$0xff]
    %v114 = vld [vmem:[#allocation7 + $0x60] sm:$0xff]
    %v115 = vld [vmem:[#allocation7 + $0x68] sm:$0xff]
    %v116 = vld [vmem:[#allocation7 + $0x70] sm:$0xff]
    %v117 = vld [vmem:[#allocation7 + $0x78] sm:$0xff]
    %v118 = vld [vmem:[#allocation8] sm:$0x1]
    %119 = vmatpush.msra.mxu0 %v101
    %120 = vmatpush.msra.mxu0 %v100
    %121 = vmatpush.msra.mxu0 %v99
    %122 = vmatpush.msra.mxu0 %v98
    %123 = vmatpush.msra.mxu0 %v97
    %124 = vmatpush.msra.mxu0 %v96
    %125 = vmatpush.msra.mxu0 %v95
    %126 = vmatpush.msra.mxu0 %v94
    %127 = vmatpush.msra.mxu0 %v93
    %128 = vmatpush.msra.mxu0 %v92
    %129 = vmatpush.msra.mxu0 %v91
    %130 = vmatpush.msra.mxu0 %v90
    %131 = vmatpush.msra.mxu0 %v89
    %132 = vmatpush.msra.mxu0 %v88
    %133 = vmatpush.msra.mxu0 %v87
    %134 = vmatpush.msra.mxu0 %v86
    %135 = vmatmul.f32.gmra.mxu0 %v84
    %v136 = vpop.f32.mrf.mxu0
    %v137 = vadd.f32 0.0, %v136
    %138 = vmatmul.f32.gmra.mxu0 %v85
    %v139 = vpop.f32.mrf.mxu0
    %v140 = vadd.f32 0.0, %v139
    %141 = vdwg.mxu0
    %v143 = vperm.slane %v118, 0
    %v145 = vsub.f32 %v143, %v137
    %v146 = vsub.f32 %v143, %v140
    %147 = vmin.xlane.f32.xlu0 %v145
    %v148 = vpop.xlane.xlu0 %147
    %149 = vmin.xlane.f32.xlu0 %v146
    %v150 = vpop.xlane.xlu0 %149
    %v151 = vlaneseq
    %v152 = vand.u32 %v151, 127
    %vm153 = vcmp.eq.f32.partialorder %v145, %v148
    %vm154 = vcmp.eq.f32.partialorder %v146, %v150
    %v155 = vsel %vm153, %v152, 2147483647
    %v156 = vsel %vm154, %v152, 2147483647
    %v157 = vand.u32 %v155, 65535
    %v158 = vshra.s32 %v155, 16
    %v159 = vcvt.s32.f32 %v157
    %v160 = vcvt.s32.f32 %v158
    %161 = vmin.xlane.f32.xlu0 %v160
    %v162 = vpop.xlane.xlu0 %161
    %vm163 = vcmp.eq.f32.partialorder %v160, %v162
    %v164 = vsel %vm163, %v159, inf
    %165 = vmin.xlane.f32.xlu0 %v164
    %v166 = vpop.xlane.xlu0 %165
    %v167 = vcvt.f32.s32 %v166
    %v168 = vcvt.f32.s32 %v162
    %v169 = vshll.u32 %v168, 16
    %v170 = vadd.s32 %v169, %v167
    %v171 = vand.u32 %v156, 65535
    %v172 = vshra.s32 %v156, 16
    %v173 = vcvt.s32.f32 %v171
    %v174 = vcvt.s32.f32 %v172
    %175 = vmin.xlane.f32.xlu0 %v174
    %v176 = vpop.xlane.xlu0 %175
    %vm177 = vcmp.eq.f32.partialorder %v174, %v176
    %v178 = vsel %vm177, %v173, inf
    %179 = vmin.xlane.f32.xlu0 %v178
    %v180 = vpop.xlane.xlu0 %179
    %v181 = vcvt.f32.s32 %v180
    %v182 = vcvt.f32.s32 %v176
    %v183 = vshll.u32 %v182, 16
    %v184 = vadd.s32 %v183, %v181
    %vm185 = vcmp.eq.s32.totalorder %v152, %v170
    %vm186 = vcmp.eq.s32.totalorder %v152, %v184
    %v187 = vsel %vm185, 1, 0
    %v188 = vsel %vm186, 1, 0
    %v189 = vcvt.s32.f32 %v187
    %v190 = vcvt.s32.f32 %v188
    %191 = vmatpush.msra.mxu0 %v117
    %192 = vmatpush.msra.mxu0 %v116
    %193 = vmatpush.msra.mxu0 %v115
    %194 = vmatpush.msra.mxu0 %v114
    %195 = vmatpush.msra.mxu0 %v113
    %196 = vmatpush.msra.mxu0 %v112
    %197 = vmatpush.msra.mxu0 %v111
    %198 = vmatpush.msra.mxu0 %v110
    %199 = vmatpush.msra.mxu0 %v109
    %200 = vmatpush.msra.mxu0 %v108
    %201 = vmatpush.msra.mxu0 %v107
    %202 = vmatpush.msra.mxu0 %v106
    %203 = vmatpush.msra.mxu0 %v105
    %204 = vmatpush.msra.mxu0 %v104
    %205 = vmatpush.msra.mxu0 %v103
    %206 = vmatpush.msra.mxu0 %v102
    %207 = vmatmul.f32.gmra.mxu0 %v189
    %v208 = vpop.f32.mrf.mxu0
    %v209 = vadd.f32 0.0, %v208
    %210 = vmatmul.f32.gmra.mxu0 %v190
    %v211 = vpop.f32.mrf.mxu0
    %v212 = vadd.f32 0.0, %v211
    %213 = vdwg.mxu0
    %v214 = vperm.slane %v170, %v152
    %v215 = vadd.s32 %v152, 4294967288
    %v216 = vperm.slane %v184, %v215
    %vm217 = vcmask 130112
    %v218 = vsel %vm217, %v216, %v214
    %vm219 = vcmask 122880
    %220 = vst.msk [vmem:[#allocation10] sm:$0x1] %vm219, %v218
    %v221 = vadd.f32 %v209, 0.0
    %v222 = vadd.f32 %v212, 0.0
    %v223 = vsub.f32 %v84, %v209
    %v224 = vsub.f32 %v85, %v212
    %s225 = scalar_lea.vmem [#allocation5], 128
    %v226 = vld [vmem:[%s225] sm:$0xff]
    %v227 = vld [vmem:[%s225 + $0x8] sm:$0xff]
    %v228 = vld [vmem:[%s225 + $0x10] sm:$0xff]
    %v229 = vld [vmem:[%s225 + $0x18] sm:$0xff]
    %v230 = vld [vmem:[%s225 + $0x20] sm:$0xff]
    %v231 = vld [vmem:[%s225 + $0x28] sm:$0xff]
    %v232 = vld [vmem:[%s225 + $0x30] sm:$0xff]
    %v233 = vld [vmem:[%s225 + $0x38] sm:$0xff]
    %v234 = vld [vmem:[%s225 + $0x40] sm:$0xff]
    %v235 = vld [vmem:[%s225 + $0x48] sm:$0xff]
    %v236 = vld [vmem:[%s225 + $0x50] sm:$0xff]
    %v237 = vld [vmem:[%s225 + $0x58] sm:$0xff]
    %v238 = vld [vmem:[%s225 + $0x60] sm:$0xff]
    %v239 = vld [vmem:[%s225 + $0x68] sm:$0xff]
    %v240 = vld [vmem:[%s225 + $0x70] sm:$0xff]
    %v241 = vld [vmem:[%s225 + $0x78] sm:$0xff]
    %s242 = scalar_lea.vmem [#allocation7], 128
    %v243 = vld [vmem:[%s242] sm:$0xff]
    %v244 = vld [vmem:[%s242 + $0x8] sm:$0xff]
    %v245 = vld [vmem:[%s242 + $0x10] sm:$0xff]
    %v246 = vld [vmem:[%s242 + $0x18] sm:$0xff]
    %v247 = vld [vmem:[%s242 + $0x20] sm:$0xff]
    %v248 = vld [vmem:[%s242 + $0x28] sm:$0xff]
    %v249 = vld [vmem:[%s242 + $0x30] sm:$0xff]
    %v250 = vld [vmem:[%s242 + $0x38] sm:$0xff]
    %v251 = vld [vmem:[%s242 + $0x40] sm:$0xff]
    %v252 = vld [vmem:[%s242 + $0x48] sm:$0xff]
    %v253 = vld [vmem:[%s242 + $0x50] sm:$0xff]
    %v254 = vld [vmem:[%s242 + $0x58] sm:$0xff]
    %v255 = vld [vmem:[%s242 + $0x60] sm:$0xff]
    %v256 = vld [vmem:[%s242 + $0x68] sm:$0xff]
    %v257 = vld [vmem:[%s242 + $0x70] sm:$0xff]
    %v258 = vld [vmem:[%s242 + $0x78] sm:$0xff]
    %s259 = scalar_lea.vmem [#allocation8], 1
    %v260 = vld [vmem:[%s259] sm:$0x1]
    %261 = vmatpush.msra.mxu0 %v241
    %262 = vmatpush.msra.mxu0 %v240
    %263 = vmatpush.msra.mxu0 %v239
    %264 = vmatpush.msra.mxu0 %v238
    %265 = vmatpush.msra.mxu0 %v237
    %266 = vmatpush.msra.mxu0 %v236
    %267 = vmatpush.msra.mxu0 %v235
    %268 = vmatpush.msra.mxu0 %v234
    %269 = vmatpush.msra.mxu0 %v233
    %270 = vmatpush.msra.mxu0 %v232
    %271 = vmatpush.msra.mxu0 %v231
    %272 = vmatpush.msra.mxu0 %v230
    %273 = vmatpush.msra.mxu0 %v229
    %274 = vmatpush.msra.mxu0 %v228
    %275 = vmatpush.msra.mxu0 %v227
    %276 = vmatpush.msra.mxu0 %v226
    %277 = vmatmul.f32.gmra.mxu0 %v223
    %v278 = vpop.f32.mrf.mxu0
    %v279 = vadd.f32 0.0, %v278
    %280 = vmatmul.f32.gmra.mxu0 %v224
    %v281 = vpop.f32.mrf.mxu0
    %v282 = vadd.f32 0.0, %v281
    %283 = vdwg.mxu0
    %v285 = vperm.slane %v260, 0
    %v287 = vsub.f32 %v285, %v279
    %v288 = vsub.f32 %v285, %v282
    %289 = vmin.xlane.f32.xlu0 %v287
    %v290 = vpop.xlane.xlu0 %289
    %291 = vmin.xlane.f32.xlu0 %v288
    %v292 = vpop.xlane.xlu0 %291
    %vm293 = vcmp.eq.f32.partialorder %v287, %v290
    %vm294 = vcmp.eq.f32.partialorder %v288, %v292
    %v295 = vsel %vm293, %v152, 2147483647
    %v296 = vsel %vm294, %v152, 2147483647
    %v297 = vand.u32 %v295, 65535
    %v298 = vshra.s32 %v295, 16
    %v299 = vcvt.s32.f32 %v297
    %v300 = vcvt.s32.f32 %v298
    %301 = vmin.xlane.f32.xlu0 %v300
    %v302 = vpop.xlane.xlu0 %301
    %vm303 = vcmp.eq.f32.partialorder %v300, %v302
    %v304 = vsel %vm303, %v299, inf
    %305 = vmin.xlane.f32.xlu0 %v304
    %v306 = vpop.xlane.xlu0 %305
    %v307 = vcvt.f32.s32 %v306
    %v308 = vcvt.f32.s32 %v302
    %v309 = vshll.u32 %v308, 16
    %v310 = vadd.s32 %v309, %v307
    %v311 = vand.u32 %v296, 65535
    %v312 = vshra.s32 %v296, 16
    %v313 = vcvt.s32.f32 %v311
    %v314 = vcvt.s32.f32 %v312
    %315 = vmin.xlane.f32.xlu0 %v314
    %v316 = vpop.xlane.xlu0 %315
    %vm317 = vcmp.eq.f32.partialorder %v314, %v316
    %v318 = vsel %vm317, %v313, inf
    %319 = vmin.xlane.f32.xlu0 %v318
    %v320 = vpop.xlane.xlu0 %319
    %v321 = vcvt.f32.s32 %v320
    %v322 = vcvt.f32.s32 %v316
    %v323 = vshll.u32 %v322, 16
    %v324 = vadd.s32 %v323, %v321
    %vm325 = vcmp.eq.s32.totalorder %v152, %v310
    %vm326 = vcmp.eq.s32.totalorder %v152, %v324
    %v327 = vsel %vm325, 1, 0
    %v328 = vsel %vm326, 1, 0
    %v329 = vcvt.s32.f32 %v327
    %v330 = vcvt.s32.f32 %v328
    %331 = vmatpush.msra.mxu0 %v258
    %332 = vmatpush.msra.mxu0 %v257
    %333 = vmatpush.msra.mxu0 %v256
    %334 = vmatpush.msra.mxu0 %v255
    %335 = vmatpush.msra.mxu0 %v254
    %336 = vmatpush.msra.mxu0 %v253
    %337 = vmatpush.msra.mxu0 %v252
    %338 = vmatpush.msra.mxu0 %v251
    %339 = vmatpush.msra.mxu0 %v250
    %340 = vmatpush.msra.mxu0 %v249
    %341 = vmatpush.msra.mxu0 %v248
    %342 = vmatpush.msra.mxu0 %v247
    %343 = vmatpush.msra.mxu0 %v246
    %344 = vmatpush.msra.mxu0 %v245
    %345 = vmatpush.msra.mxu0 %v244
    %346 = vmatpush.msra.mxu0 %v243
    %347 = vmatmul.f32.gmra.mxu0 %v329
    %v348 = vpop.f32.mrf.mxu0
    %v349 = vadd.f32 0.0, %v348
    %350 = vmatmul.f32.gmra.mxu0 %v330
    %v351 = vpop.f32.mrf.mxu0
    %v352 = vadd.f32 0.0, %v351
    %353 = vdwg.mxu0
    %v354 = vperm.slane %v310, %v152
    %v355 = vperm.slane %v324, %v215
    %v356 = vsel %vm217, %v355, %v354
    %357 = vst.msk [vmem:[#allocation10 + $0x1] sm:$0x1] %vm219, %v356
    %v358 = vadd.f32 %v221, %v349
    %v359 = vadd.f32 %v222, %v352
    %v360 = vsub.f32 %v223, %v349
    %v361 = vsub.f32 %v224, %v352
    %s362 = scalar_lea.vmem [#allocation5], 256
    %v363 = vld [vmem:[%s362] sm:$0xff]
    %v364 = vld [vmem:[%s362 + $0x8] sm:$0xff]
    %v365 = vld [vmem:[%s362 + $0x10] sm:$0xff]
    %v366 = vld [vmem:[%s362 + $0x18] sm:$0xff]
    %v367 = vld [vmem:[%s362 + $0x20] sm:$0xff]
    %v368 = vld [vmem:[%s362 + $0x28] sm:$0xff]
    %v369 = vld [vmem:[%s362 + $0x30] sm:$0xff]
    %v370 = vld [vmem:[%s362 + $0x38] sm:$0xff]
    %v371 = vld [vmem:[%s362 + $0x40] sm:$0xff]
    %v372 = vld [vmem:[%s362 + $0x48] sm:$0xff]
    %v373 = vld [vmem:[%s362 + $0x50] sm:$0xff]
    %v374 = vld [vmem:[%s362 + $0x58] sm:$0xff]
    %v375 = vld [vmem:[%s362 + $0x60] sm:$0xff]
    %v376 = vld [vmem:[%s362 + $0x68] sm:$0xff]
    %v377 = vld [vmem:[%s362 + $0x70] sm:$0xff]
    %v378 = vld [vmem:[%s362 + $0x78] sm:$0xff]
    %s379 = scalar_lea.vmem [#allocation7], 256
    %v380 = vld [vmem:[%s379] sm:$0xff]
    %v381 = vld [vmem:[%s379 + $0x8] sm:$0xff]
    %v382 = vld [vmem:[%s379 + $0x10] sm:$0xff]
    %v383 = vld [vmem:[%s379 + $0x18] sm:$0xff]
    %v384 = vld [vmem:[%s379 + $0x20] sm:$0xff]
    %v385 = vld [vmem:[%s379 + $0x28] sm:$0xff]
    %v386 = vld [vmem:[%s379 + $0x30] sm:$0xff]
    %v387 = vld [vmem:[%s379 + $0x38] sm:$0xff]
    %v388 = vld [vmem:[%s379 + $0x40] sm:$0xff]
    %v389 = vld [vmem:[%s379 + $0x48] sm:$0xff]
    %v390 = vld [vmem:[%s379 + $0x50] sm:$0xff]
    %v391 = vld [vmem:[%s379 + $0x58] sm:$0xff]
    %v392 = vld [vmem:[%s379 + $0x60] sm:$0xff]
    %v393 = vld [vmem:[%s379 + $0x68] sm:$0xff]
    %v394 = vld [vmem:[%s379 + $0x70] sm:$0xff]
    %v395 = vld [vmem:[%s379 + $0x78] sm:$0xff]
    %s396 = scalar_lea.vmem [#allocation8], 2
    %v397 = vld [vmem:[%s396] sm:$0x1]
    %398 = vmatpush.msra.mxu0 %v378
    %399 = vmatpush.msra.mxu0 %v377
    %400 = vmatpush.msra.mxu0 %v376
    %401 = vmatpush.msra.mxu0 %v375
    %402 = vmatpush.msra.mxu0 %v374
    %403 = vmatpush.msra.mxu0 %v373
    %404 = vmatpush.msra.mxu0 %v372
    %405 = vmatpush.msra.mxu0 %v371
    %406 = vmatpush.msra.mxu0 %v370
    %407 = vmatpush.msra.mxu0 %v369
    %408 = vmatpush.msra.mxu0 %v368
    %409 = vmatpush.msra.mxu0 %v367
    %410 = vmatpush.msra.mxu0 %v366
    %411 = vmatpush.msra.mxu0 %v365
    %412 = vmatpush.msra.mxu0 %v364
    %413 = vmatpush.msra.mxu0 %v363
    %414 = vmatmul.f32.gmra.mxu0 %v360
    %v415 = vpop.f32.mrf.mxu0
    %v416 = vadd.f32 0.0, %v415
    %417 = vmatmul.f32.gmra.mxu0 %v361
    %v418 = vpop.f32.mrf.mxu0
    %v419 = vadd.f32 0.0, %v418
    %420 = vdwg.mxu0
    %v422 = vperm.slane %v397, 0
    %v424 = vsub.f32 %v422, %v416
    %v425 = vsub.f32 %v422, %v419
    %426 = vmin.xlane.f32.xlu0 %v424
    %v427 = vpop.xlane.xlu0 %426
    %428 = vmin.xlane.f32.xlu0 %v425
    %v429 = vpop.xlane.xlu0 %428
    %vm430 = vcmp.eq.f32.partialorder %v424, %v427
    %vm431 = vcmp.eq.f32.partialorder %v425, %v429
    %v432 = vsel %vm430, %v152, 2147483647
    %v433 = vsel %vm431, %v152, 2147483647
    %v434 = vand.u32 %v432, 65535
    %v435 = vshra.s32 %v432, 16
    %v436 = vcvt.s32.f32 %v434
    %v437 = vcvt.s32.f32 %v435
    %438 = vmin.xlane.f32.xlu0 %v437
    %v439 = vpop.xlane.xlu0 %438
    %vm440 = vcmp.eq.f32.partialorder %v437, %v439
    %v441 = vsel %vm440, %v436, inf
    %442 = vmin.xlane.f32.xlu0 %v441
    %v443 = vpop.xlane.xlu0 %442
    %v444 = vcvt.f32.s32 %v443
    %v445 = vcvt.f32.s32 %v439
    %v446 = vshll.u32 %v445, 16
    %v447 = vadd.s32 %v446, %v444
    %v448 = vand.u32 %v433, 65535
    %v449 = vshra.s32 %v433, 16
    %v450 = vcvt.s32.f32 %v448
    %v451 = vcvt.s32.f32 %v449
    %452 = vmin.xlane.f32.xlu0 %v451
    %v453 = vpop.xlane.xlu0 %452
    %vm454 = vcmp.eq.f32.partialorder %v451, %v453
    %v455 = vsel %vm454, %v450, inf
    %456 = vmin.xlane.f32.xlu0 %v455
    %v457 = vpop.xlane.xlu0 %456
    %v458 = vcvt.f32.s32 %v457
    %v459 = vcvt.f32.s32 %v453
    %v460 = vshll.u32 %v459, 16
    %v461 = vadd.s32 %v460, %v458
    %vm462 = vcmp.eq.s32.totalorder %v152, %v447
    %vm463 = vcmp.eq.s32.totalorder %v152, %v461
    %v464 = vsel %vm462, 1, 0
    %v465 = vsel %vm463, 1, 0
    %v466 = vcvt.s32.f32 %v464
    %v467 = vcvt.s32.f32 %v465
    %468 = vmatpush.msra.mxu0 %v395
    %469 = vmatpush.msra.mxu0 %v394
    %470 = vmatpush.msra.mxu0 %v393
    %471 = vmatpush.msra.mxu0 %v392
    %472 = vmatpush.msra.mxu0 %v391
    %473 = vmatpush.msra.mxu0 %v390
    %474 = vmatpush.msra.mxu0 %v389
    %475 = vmatpush.msra.mxu0 %v388
    %476 = vmatpush.msra.mxu0 %v387
    %477 = vmatpush.msra.mxu0 %v386
    %478 = vmatpush.msra.mxu0 %v385
    %479 = vmatpush.msra.mxu0 %v384
    %480 = vmatpush.msra.mxu0 %v383
    %481 = vmatpush.msra.mxu0 %v382
    %482 = vmatpush.msra.mxu0 %v381
    %483 = vmatpush.msra.mxu0 %v380
    %484 = vmatmul.f32.gmra.mxu0 %v466
    %v485 = vpop.f32.mrf.mxu0
    %v486 = vadd.f32 0.0, %v485
    %487 = vmatmul.f32.gmra.mxu0 %v467
    %v488 = vpop.f32.mrf.mxu0
    %v489 = vadd.f32 0.0, %v488
    %490 = vdwg.mxu0
    %v491 = vperm.slane %v447, %v152
    %v492 = vperm.slane %v461, %v215
    %v493 = vsel %vm217, %v492, %v491
    %494 = vst.msk [vmem:[#allocation10 + $0x2] sm:$0x1] %vm219, %v493
    %v495 = vadd.f32 %v358, %v486
    %v496 = vadd.f32 %v359, %v489
    %497 = vst [vmem:[#allocation11] sm:$0xff] %v495
    %498 = vst [vmem:[#allocation11 + $0x8] sm:$0xff] %v496
    // Predicated region
    $region34: #{tpu_custom_call.1} parent=1 // pred_check
      _
    $region35: #{tpu_custom_call.1} parent=1 // pred_check_branch
      %500 = sbr.rel (0) target = $region37
    $region36: #{tpu_custom_call.1} parent=1 // pred_region
      %502 = vsyncadd [#allocation4], 0
      %s504 = sshll.u32 [#allocation10], 4
      %s505 = int_to_ptr.vmem [resolvable:$true] %s504
      %s506 = sshll.u32 %s4, 4
      %s507 = int_to_ptr.hbm [resolvable:$true] %s506
      %509 = dma.vmem_to_hbm [thread:$0]  %s505, 64, %s507, [#allocation4]
    $region37: #{tpu_custom_call.1} parent=1 // pred_fallthru
      _
    // Predicated region
    $region38: #{tpu_custom_call.1} parent=1 // pred_check
      _
    $region39: #{tpu_custom_call.1} parent=1 // pred_check_branch
      %511 = sbr.rel (0) target = $region41
    $region40: #{tpu_custom_call.1} parent=1 // pred_region
      %513 = vsyncadd [#allocation12], 0
      %s514 = sshll.u32 [#allocation11], 4
      %s515 = int_to_ptr.vmem [resolvable:$true] %s514
      %s516 = sshll.u32 %s5, 4
      %s517 = int_to_ptr.hbm [resolvable:$true] %s516
      %522 = dma.vmem_to_hbm [thread:$0]  %s515, 256, %s517, [#allocation12], 128, 128, 8
    $region41: #{tpu_custom_call.1} parent=1 // pred_fallthru
      _
    // Predicated region
    $region42: #{tpu_custom_call.1} parent=1 // pred_check
      _
    $region43: #{tpu_custom_call.1} parent=1 // pred_check_branch
      %524 = sbr.rel (0) target = $region45
    $region44: #{tpu_custom_call.1} parent=1 // pred_region
      %526 = dma.done [#allocation4], 64
    $region45: #{tpu_custom_call.1} parent=1 // pred_fallthru
      _
    // Predicated region
    $region46: #{tpu_custom_call.1} parent=1 // pred_check
      _
    $region47: #{tpu_custom_call.1} parent=1 // pred_check_branch
      %528 = sbr.rel (0) target = $region49
    $region48: #{tpu_custom_call.1} parent=1 // pred_region
      %530 = dma.done [#allocation12], 256
    $region49: #{tpu_custom_call.1} parent=1 // pred_fallthru
      _
    %531 = vsyncpa [#allocation3], 1
    %532 = vsyncpa [#allocation6], 1
    %533 = vsyncpa [#allocation9], 1
    %534 = vsyncpa [#allocation4], 1
    %535 = vsyncpa [#allocation12], 1

</llo_original>
